<compile_context>
chip_gen: v7x
topology: tpu7x:2x2x1
jax: 0.10.0
libtpu: 0.0.40
codegen_flags: <defaults>
</compile_context>

<pallas_src>
import jax
import jax.numpy as jnp
from jax.experimental import pallas as pl
from jax.experimental.pallas import tpu as pltpu

# hands.weight is fixed / non-trainable (requires_grad=False) in the PyTorch
# module -> baked in as compile-time constants.
_HANDS_W = (1.5, 3.0, 4.5)

_LANES = 128
# 2048 rows x 128 lanes = 262144 elements / grid step
#   -> x 1 MiB + out 1 MiB + ctrl 3 MiB = 5 MiB per block set, ~10 MiB double
#      buffered; fits v5e/v6e/v7x scoped VMEM with the explicit limit below.
_ROW_TILE = 2048


def motivation_kernel(w1_ref, b1_ref, x_ref, out_ref, ctrl_ref):
    """w1_ref, b1_ref: SMEM (3,) f32 scalars.
    x_ref, out_ref: (TR, 128) VMEM blocks; ctrl_ref: (3, TR, 128) VMEM block."""
    x = x_ref[...]                                     # (TR, 128), fully dense
    out = jnp.zeros_like(x)
    # Static 3-iteration Python loop; each channel is a dense (TR, 128) slab,
    # so the EUP exp pushes and the control stores are unmasked/dense.
    for i in range(3):
        z = x * w1_ref[i] + b1_ref[i]                  # Linear(1->3): VPU FMA
        c = 1.0 / (1.0 + jnp.exp(-z))                  # exact sigmoid (EUP exp)
        ctrl_ref[i] = c                                # dense (TR, 128) store
        out = out + _HANDS_W[i] * c                    # Linear(3->1): 3 FMAs
    out_ref[...] = out


def motivation_nn(x, mind_weight, mind_bias, *, row_tile=_ROW_TILE,
                  lane_major_control=False):
    """x: (B, 1) f32; mind_weight: (3, 1); mind_bias: (3,).

    Returns (output (B, 1), control (B, 3)) matching MotivationNN.forward(x).
    With lane_major_control=True, control is returned as (3, B) (no XLA
    transpose) for consumers that can accept the lane-major layout.
    """
    B = x.shape[0]
    w1 = mind_weight.astype(jnp.float32).reshape(3)    # 3 scalars -> SMEM
    b1 = mind_bias.astype(jnp.float32).reshape(3)      # 3 scalars -> SMEM

    # Batch -> (rows, 128): sublane- and lane-dense.  Only pad to the next
    # multiple of 128 (and only if needed); the reshape itself is free.
    x_flat = x.astype(jnp.float32).reshape(B)
    b_pad = pl.cdiv(B, _LANES) * _LANES
    if b_pad != B:
        x_flat = jnp.pad(x_flat, (0, b_pad - B))
    rows = b_pad // _LANES
    x2d = x_flat.reshape(rows, _LANES)

    # Whole-array block for small inputs; otherwise a multiple-of-8 row tile.
    # Raggedness (rows % tile_rows != 0) is handled by Pallas: OOB reads of the
    # last block are undefined-but-unused, OOB writes are dropped.
    tile_rows = rows if rows <= row_tile else row_tile
    grid = (pl.cdiv(rows, tile_rows),)

    out2d, ctrl3d = pl.pallas_call(
        motivation_kernel,
        out_shape=(
            jax.ShapeDtypeStruct((rows, _LANES), jnp.float32),      # output
            jax.ShapeDtypeStruct((3, rows, _LANES), jnp.float32),   # control
        ),
        grid=grid,
        in_specs=[
            pl.BlockSpec(memory_space=pltpu.MemorySpace.SMEM),      # w1 (3,)
            pl.BlockSpec(memory_space=pltpu.MemorySpace.SMEM),      # b1 (3,)
            pl.BlockSpec((tile_rows, _LANES), lambda i: (i, 0)),    # x
        ],
        out_specs=(
            pl.BlockSpec((tile_rows, _LANES), lambda i: (i, 0)),
            pl.BlockSpec((3, tile_rows, _LANES), lambda i: (0, i, 0)),
        ),
        compiler_params=pltpu.CompilerParams(
            dimension_semantics=("parallel",),       # megacore-shards row blocks
            vmem_limit_bytes=32 * 1024 * 1024,       # big blocks on all gens
        ),
    )(w1, b1, x2d)

    output = out2d.reshape(b_pad)[:B].reshape(B, 1)
    ctrl_lane_major = ctrl3d.reshape(3, b_pad)[:, :B]            # (3, B)
    if lane_major_control:
        control = ctrl_lane_major
    else:
        control = ctrl_lane_major.T                              # (B, 3) PyTorch layout
    return output, control


if __name__ == "__main__":
    key = jax.random.PRNGKey(0)
    k_x, k_w1, k_b1, k_x2 = jax.random.split(key, 4)

    # PyTorch Linear(1, 3) init range is U(-1, 1) since fan_in = 1.
    mind_weight = jax.random.uniform(k_w1, (3, 1), jnp.float32, -1.0, 1.0)
    mind_bias = jax.random.uniform(k_b1, (3,), jnp.float32, -1.0, 1.0)
    hands_weight = jnp.array([[1.5, 3.0, 4.5]], dtype=jnp.float32)

    def reference(xv):
        c = jax.nn.sigmoid(xv @ mind_weight.T + mind_bias[None, :])
        return c @ hands_weight.T, c

    # --- Small batch: single whole-array block. ---
    B = 8
    x = jax.random.normal(k_x, (B, 1), dtype=jnp.float32)
    output, control = motivation_nn(x, mind_weight, mind_bias)
    jax.block_until_ready((output, control))
    out_ref, ctrl_ref = reference(x)
    assert output.shape == (B, 1) and control.shape == (B, 3)
    assert jnp.allclose(control, ctrl_ref, atol=1e-5, rtol=1e-5)
    assert jnp.allclose(output, out_ref, atol=1e-5, rtol=1e-5)

    # --- Multi-block + ragged-tail path (B not a multiple of 128, rows not a
    # multiple of the test-only small row tile -> grid=3 with a ragged last
    # block whose out-of-bounds writes are dropped). ---
    B2 = 2500
    x2 = jax.random.normal(k_x2, (B2, 1), dtype=jnp.float32)
    output2, control2 = motivation_nn(x2, mind_weight, mind_bias, row_tile=8)
    jax.block_until_ready((output2, control2))
    out2_ref, ctrl2_ref = reference(x2)
    assert output2.shape == (B2, 1) and control2.shape == (B2, 3)
    assert jnp.allclose(control2, ctrl2_ref, atol=1e-5, rtol=1e-5)
    assert jnp.allclose(output2, out2_ref, atol=1e-5, rtol=1e-5)

    print("KERNEL_OK")
</pallas_src>

<mosaic_0001>
module attributes {stable_mosaic.version = 11 : i64} {
  func.func @motivation_kernel(%arg0: i32, %arg1: memref<3xf32, #tpu.memory_space<smem>>, %arg2: memref<3xf32, #tpu.memory_space<smem>>, %arg3: memref<1x128xf32, #tpu.memory_space<vmem>>, %arg4: memref<1x128xf32, #tpu.memory_space<vmem>>, %arg5: memref<3x1x128xf32, #tpu.memory_space<vmem>>) attributes {dimension_semantics = [#tpu.dimension_semantics<parallel>], iteration_bounds = array<i64: 1>, scalar_prefetch = 0 : i64, scratch_operands = 0 : i64, tpu.core_type = #tpu.core_type<tc>, window_params = [{transform_indices = @transform_0, window_bounds = array<i64: 3>}, {transform_indices = @transform_1, window_bounds = array<i64: 3>}, {transform_indices = @transform_2, window_bounds = array<i64: 1, 128>}, {transform_indices = @transform_3, window_bounds = array<i64: 1, 128>}, {transform_indices = @transform_4, window_bounds = array<i64: 3, 1, 128>}]} {
    %c0 = arith.constant 0 : index
    %c0_0 = arith.constant 0 : index
    %0 = vector.load %arg3[%c0, %c0_0] : memref<1x128xf32, #tpu.memory_space<vmem>>, vector<1x128xf32>
    %cst = arith.constant 0.000000e+00 : f32
    %1 = vector.broadcast %cst : f32 to vector<1x128xf32>
    %c0_1 = arith.constant 0 : index
    %2 = memref.load %arg1[%c0_1] : memref<3xf32, #tpu.memory_space<smem>>
    %3 = vector.broadcast %2 : f32 to vector<1x128xf32>
    %4 = arith.mulf %0, %3 : vector<1x128xf32>
    %c0_2 = arith.constant 0 : index
    %5 = memref.load %arg2[%c0_2] : memref<3xf32, #tpu.memory_space<smem>>
    %6 = vector.broadcast %5 : f32 to vector<1x128xf32>
    %7 = arith.addf %4, %6 : vector<1x128xf32>
    %cst_3 = arith.constant 0.000000e+00 : f32
    %8 = vector.broadcast %cst_3 : f32 to vector<1x128xf32>
    %9 = arith.subf %8, %7 : vector<1x128xf32>
    %10 = math.exp %9 : vector<1x128xf32>
    %cst_4 = arith.constant 1.000000e+00 : f32
    %11 = vector.broadcast %cst_4 : f32 to vector<1x128xf32>
    %12 = arith.addf %11, %10 : vector<1x128xf32>
    %cst_5 = arith.constant 1.000000e+00 : f32
    %13 = vector.broadcast %cst_5 : f32 to vector<1x128xf32>
    %14 = arith.divf %13, %12 : vector<1x128xf32>
    %c0_6 = arith.constant 0 : index
    %c0_7 = arith.constant 0 : index
    %c0_8 = arith.constant 0 : index
    %15 = vector.load %arg5[%c0_6, %c0_7, %c0_8] : memref<3x1x128xf32, #tpu.memory_space<vmem>>, vector<1x1x128xf32>
    %16 = vector.shape_cast %15 : vector<1x1x128xf32> to vector<1x128xf32>
    %17 = vector.shape_cast %14 : vector<1x128xf32> to vector<1x1x128xf32>
    tpu.vector_store %arg5[%c0_6, %c0_7, %c0_8], %17 {strides = array<i32>} : memref<3x1x128xf32, #tpu.memory_space<vmem>>, vector<1x1x128xf32>,
    %cst_9 = arith.constant 1.500000e+00 : f32
    %18 = vector.broadcast %cst_9 : f32 to vector<1x128xf32>
    %19 = arith.mulf %18, %14 : vector<1x128xf32>
    %20 = arith.addf %1, %19 : vector<1x128xf32>
    %c1 = arith.constant 1 : index
    %21 = memref.load %arg1[%c1] : memref<3xf32, #tpu.memory_space<smem>>
    %22 = vector.broadcast %21 : f32 to vector<1x128xf32>
    %23 = arith.mulf %0, %22 : vector<1x128xf32>
    %c1_10 = arith.constant 1 : index
    %24 = memref.load %arg2[%c1_10] : memref<3xf32, #tpu.memory_space<smem>>
    %25 = vector.broadcast %24 : f32 to vector<1x128xf32>
    %26 = arith.addf %23, %25 : vector<1x128xf32>
    %cst_11 = arith.constant 0.000000e+00 : f32
    %27 = vector.broadcast %cst_11 : f32 to vector<1x128xf32>
    %28 = arith.subf %27, %26 : vector<1x128xf32>
    %29 = math.exp %28 : vector<1x128xf32>
    %cst_12 = arith.constant 1.000000e+00 : f32
    %30 = vector.broadcast %cst_12 : f32 to vector<1x128xf32>
    %31 = arith.addf %30, %29 : vector<1x128xf32>
    %cst_13 = arith.constant 1.000000e+00 : f32
    %32 = vector.broadcast %cst_13 : f32 to vector<1x128xf32>
    %33 = arith.divf %32, %31 : vector<1x128xf32>
    %c1_14 = arith.constant 1 : index
    %c0_15 = arith.constant 0 : index
    %c0_16 = arith.constant 0 : index
    %34 = vector.load %arg5[%c1_14, %c0_15, %c0_16] : memref<3x1x128xf32, #tpu.memory_space<vmem>>, vector<1x1x128xf32>
    %35 = vector.shape_cast %34 : vector<1x1x128xf32> to vector<1x128xf32>
    %36 = vector.shape_cast %33 : vector<1x128xf32> to vector<1x1x128xf32>
    tpu.vector_store %arg5[%c1_14, %c0_15, %c0_16], %36 {strides = array<i32>} : memref<3x1x128xf32, #tpu.memory_space<vmem>>, vector<1x1x128xf32>,
    %cst_17 = arith.constant 3.000000e+00 : f32
    %37 = vector.broadcast %cst_17 : f32 to vector<1x128xf32>
    %38 = arith.mulf %37, %33 : vector<1x128xf32>
    %39 = arith.addf %20, %38 : vector<1x128xf32>
    %c2 = arith.constant 2 : index
    %40 = memref.load %arg1[%c2] : memref<3xf32, #tpu.memory_space<smem>>
    %41 = vector.broadcast %40 : f32 to vector<1x128xf32>
    %42 = arith.mulf %0, %41 : vector<1x128xf32>
    %c2_18 = arith.constant 2 : index
    %43 = memref.load %arg2[%c2_18] : memref<3xf32, #tpu.memory_space<smem>>
    %44 = vector.broadcast %43 : f32 to vector<1x128xf32>
    %45 = arith.addf %42, %44 : vector<1x128xf32>
    %cst_19 = arith.constant 0.000000e+00 : f32
    %46 = vector.broadcast %cst_19 : f32 to vector<1x128xf32>
    %47 = arith.subf %46, %45 : vector<1x128xf32>
    %48 = math.exp %47 : vector<1x128xf32>
    %cst_20 = arith.constant 1.000000e+00 : f32
    %49 = vector.broadcast %cst_20 : f32 to vector<1x128xf32>
    %50 = arith.addf %49, %48 : vector<1x128xf32>
    %cst_21 = arith.constant 1.000000e+00 : f32
    %51 = vector.broadcast %cst_21 : f32 to vector<1x128xf32>
    %52 = arith.divf %51, %50 : vector<1x128xf32>
    %c2_22 = arith.constant 2 : index
    %c0_23 = arith.constant 0 : index
    %c0_24 = arith.constant 0 : index
    %53 = vector.load %arg5[%c2_22, %c0_23, %c0_24] : memref<3x1x128xf32, #tpu.memory_space<vmem>>, vector<1x1x128xf32>
    %54 = vector.shape_cast %53 : vector<1x1x128xf32> to vector<1x128xf32>
    %55 = vector.shape_cast %52 : vector<1x128xf32> to vector<1x1x128xf32>
    tpu.vector_store %arg5[%c2_22, %c0_23, %c0_24], %55 {strides = array<i32>} : memref<3x1x128xf32, #tpu.memory_space<vmem>>, vector<1x1x128xf32>,
    %cst_25 = arith.constant 4.500000e+00 : f32
    %56 = vector.broadcast %cst_25 : f32 to vector<1x128xf32>
    %57 = arith.mulf %56, %52 : vector<1x128xf32>
    %58 = arith.addf %39, %57 : vector<1x128xf32>
    %c0_26 = arith.constant 0 : index
    %c0_27 = arith.constant 0 : index
    %59 = vector.load %arg4[%c0_26, %c0_27] : memref<1x128xf32, #tpu.memory_space<vmem>>, vector<1x128xf32>
    tpu.vector_store %arg4[%c0_26, %c0_27], %58 {strides = array<i32>} : memref<1x128xf32, #tpu.memory_space<vmem>>, vector<1x128xf32>,
    return
  }
  func.func @transform_0(%arg0: i32) -> i32 {
    %c0_i32 = arith.constant 0 : i32
    %c0_i32_0 = arith.constant 0 : i32
    return %c0_i32 : i32
  }
  func.func @transform_1(%arg0: i32) -> i32 {
    %c0_i32 = arith.constant 0 : i32
    %c0_i32_0 = arith.constant 0 : i32
    return %c0_i32 : i32
  }
  func.func @transform_2(%arg0: i32) -> (i32, i32) {
    %c0_i32 = arith.constant 0 : i32
    %c0_i32_0 = arith.constant 0 : i32
    return %arg0, %c0_i32 : i32, i32
  }
  func.func @transform_3(%arg0: i32) -> (i32, i32) {
    %c0_i32 = arith.constant 0 : i32
    %c0_i32_0 = arith.constant 0 : i32
    return %arg0, %c0_i32 : i32, i32
  }
  func.func @transform_4(%arg0: i32) -> (i32, i32, i32) {
    %c0_i32 = arith.constant 0 : i32
    %c0_i32_0 = arith.constant 0 : i32
    %c0_i32_1 = arith.constant 0 : i32
    return %c0_i32, %arg0, %c0_i32_0 : i32, i32, i32
  }
}

</mosaic_0001>

<llo_original>
// kernel: tpu_custom_call.1
$region0: #{tpu_custom_call.1}
  #allocation0 [shape = 'u32[]', space=smem, size = 0x4, offset = 0x4, fixed_abs, tag = 'smem constant byte address 0x4 - core index']
  #allocation1 [shape = 'u32[144,128]{1,0:T(1,128)}', space=vmem, size = 0x12000, scoped, tag = 'internal scratch']
  %s0 = inlined_call_operand.hbm [shape: f32[3], index: 0, kind: input, shape index: {}]
  %s1 = inlined_call_operand.vmem [shape: f32[3], index: 1, kind: input, shape index: {}]
  %s2 = inlined_call_operand.vmem [shape: f32[1,128], index: 2, kind: input, shape index: {}]
  %s3 = inlined_call_operand.hbm [shape: f32[1,128], index: 3, kind: output, shape index: {0}]
  %s4 = inlined_call_operand.hbm [shape: f32[3,1,128], index: 4, kind: output, shape index: {1}]
  %5 = xla_tuple %s3, %s4
  %s6 = sld [smem:[#allocation0]]
  $region38: #{tpu_custom_call.1} parent=0
    _
  %s8 = ssub.s32 1, %s6
  %s9 = scalar_select 0, %s8, %s6
  $region1: #{tpu_custom_call.1} parent=0
    #allocation2 [shape = 'u8[512]{0}', space=smem, size = 0x200, scoped, tag = 'input window, operand 0, single buffered']
    #allocation3 [shape = 's32[1]{0}', space=sflag, size = 0x4, scoped, tag = 'scoped memory for tpu_custom_call.1']
    #allocation4 [shape = 's32[1]{0}', space=sflag, size = 0x4, scoped, tag = 'scoped memory for tpu_custom_call.1']
    #allocation5 [shape = 's32[1]{0}', space=sflag, size = 0x4, scoped, tag = 'scoped memory for tpu_custom_call.1']
    #allocation6 [shape = 'u8[512]{0}', space=smem, size = 0x200, scoped, tag = 'input window, operand 1, single buffered']
    #allocation7 [shape = 'u8[512]{0}', space=vmem, size = 0x400, scoped, tag = 'output window, operand 0, single buffered']
    #allocation8 [shape = 'u8[1536]{0}', space=vmem, size = 0x800, scoped, tag = 'output window, operand 1, single buffered']
    #allocation9 [shape = 's32[1]{0}', space=sflag, size = 0x4, scoped, tag = 'scoped memory for tpu_custom_call.1']
    %10 = vsyncpa [#allocation4], 0
    %11 = vsyncpa [#allocation5], 0
    %12 = vsyncpa [#allocation3], 0
    %13 = vsyncpa [#allocation9], 0
    // Predicated region
    $region2: #{tpu_custom_call.1} parent=1 // pred_check
      _
    $region3: #{tpu_custom_call.1} parent=1 // pred_check_branch
      %15 = sbr.rel (0) target = $region5
    $region4: #{tpu_custom_call.1} parent=1 // pred_region
      %s17 = ssub.s32 16, 16
      %18 = vsyncadd [#allocation4], %s17
      %21 = dma.hbm_to_smem %s0, 16, [#allocation2], [#allocation4]
    $region5: #{tpu_custom_call.1} parent=1 // pred_fallthru
      _
    // Predicated region
    $region6: #{tpu_custom_call.1} parent=1 // pred_check
      _
    $region7: #{tpu_custom_call.1} parent=1 // pred_check_branch
      %23 = sbr.rel (0) target = $region9
    $region8: #{tpu_custom_call.1} parent=1 // pred_region
      %s25 = ssub.s32 16, 16
      %26 = vsyncadd [#allocation5], %s25
      %s28 = sshll.u32 %s1, 4
      %s29 = int_to_ptr.vmem [resolvable:$true] %s28
      %31 = dma.vmem_to_smem %s29, 16, [#allocation6], [#allocation5]
    $region9: #{tpu_custom_call.1} parent=1 // pred_fallthru
      _
    // Predicated region
    $region10: #{tpu_custom_call.1} parent=1 // pred_check
      _
    $region11: #{tpu_custom_call.1} parent=1 // pred_check_branch
      %33 = sbr.rel (0) target = $region13
    $region12: #{tpu_custom_call.1} parent=1 // pred_region
      _
    $region13: #{tpu_custom_call.1} parent=1 // pred_fallthru
      _
    // Predicated region
    $region14: #{tpu_custom_call.1} parent=1 // pred_check
      _
    $region15: #{tpu_custom_call.1} parent=1 // pred_check_branch
      %35 = sbr.rel (0) target = $region17
    $region16: #{tpu_custom_call.1} parent=1 // pred_region
      %36 = dma.done [#allocation4], 16
    $region17: #{tpu_custom_call.1} parent=1 // pred_fallthru
      _
    // Predicated region
    $region18: #{tpu_custom_call.1} parent=1 // pred_check
      _
    $region19: #{tpu_custom_call.1} parent=1 // pred_check_branch
      %38 = sbr.rel (0) target = $region21
    $region20: #{tpu_custom_call.1} parent=1 // pred_region
      %39 = dma.done [#allocation5], 16
    $region21: #{tpu_custom_call.1} parent=1 // pred_fallthru
      _
    %40 = sfence
    %v41 = vld [vmem:[%s2] sm:$0x1]
    %s42 = sld [smem:[#allocation2]]
    %v43 = vstv %s42
    %v44 = vmul.f32 %v41, %v43
    %s45 = sld [smem:[#allocation6]]
    %v46 = vstv %s45
    %v47 = vadd.f32 %v44, %v46
    %v48 = vsub.f32 0.0, %v47
    %v49 = vmul.f32 %v48, 1.442695
    %v50 = vpow.pop %v49
    %v51 = vadd.f32 %v50, 1.0
    %v52 = vrcp.pop %v51
    %v53 = vmul.f32 1.0, %v52
    %54 = vst [vmem:[#allocation8] sm:$0x1] %v53
    %v55 = vmul.f32 %v53, 1.5
    %v56 = vadd.f32 %v55, 0.0
    %s57 = sld [smem:[#allocation2 + $0x1]]
    %v58 = vstv %s57
    %v59 = vmul.f32 %v41, %v58
    %s60 = sld [smem:[#allocation6 + $0x1]]
    %v61 = vstv %s60
    %v62 = vadd.f32 %v59, %v61
    %v63 = vsub.f32 0.0, %v62
    %v64 = vmul.f32 %v63, 1.442695
    %v65 = vpow.pop %v64
    %v66 = vadd.f32 %v65, 1.0
    %v67 = vrcp.pop %v66
    %v68 = vmul.f32 1.0, %v67
    %s69 = scalar_lea.vmem [#allocation8], 1
    %70 = vst [vmem:[%s69] sm:$0x1] %v68
    %v71 = vmul.f32 %v68, 3.0
    %v72 = vadd.f32 %v56, %v71
    %s73 = sld [smem:[#allocation2 + $0x2]]
    %v74 = vstv %s73
    %v75 = vmul.f32 %v41, %v74
    %s76 = sld [smem:[#allocation6 + $0x2]]
    %v77 = vstv %s76
    %v78 = vadd.f32 %v75, %v77
    %v79 = vsub.f32 0.0, %v78
    %v80 = vmul.f32 %v79, 1.442695
    %v81 = vpow.pop %v80
    %v82 = vadd.f32 %v81, 1.0
    %v83 = vrcp.pop %v82
    %v84 = vmul.f32 1.0, %v83
    %s85 = scalar_lea.vmem [#allocation8], 2
    %86 = vst [vmem:[%s85] sm:$0x1] %v84
    %v87 = vmul.f32 %v84, 4.5
    %v88 = vadd.f32 %v72, %v87
    %89 = vst [vmem:[#allocation7] sm:$0x1] %v88
    // Predicated region
    $region22: #{tpu_custom_call.1} parent=1 // pred_check
      _
    $region23: #{tpu_custom_call.1} parent=1 // pred_check_branch
      %91 = sbr.rel (0) target = $region25
    $region24: #{tpu_custom_call.1} parent=1 // pred_region
      %s93 = ssub.s32 16, 16
      %94 = vsyncadd [#allocation3], %s93
      %s96 = sshll.u32 [#allocation7], 4
      %s97 = int_to_ptr.vmem [resolvable:$true] %s96
      %99 = dma.vmem_to_hbm [thread:$0]  %s97, 16, %s3, [#allocation3]
    $region25: #{tpu_custom_call.1} parent=1 // pred_fallthru
      _
    // Predicated region
    $region26: #{tpu_custom_call.1} parent=1 // pred_check
      _
    $region27: #{tpu_custom_call.1} parent=1 // pred_check_branch
      %101 = sbr.rel (0) target = $region29
    $region28: #{tpu_custom_call.1} parent=1 // pred_region
      %s103 = ssub.s32 48, 48
      %104 = vsyncadd [#allocation9], %s103
      %s105 = sshll.u32 [#allocation8], 4
      %s106 = int_to_ptr.vmem [resolvable:$true] %s105
      %111 = dma.vmem_to_hbm [thread:$0]  %s106, 48, %s4, [#allocation9], 16, 16, 1
    $region29: #{tpu_custom_call.1} parent=1 // pred_fallthru
      _
    // Predicated region
    $region30: #{tpu_custom_call.1} parent=1 // pred_check
      _
    $region31: #{tpu_custom_call.1} parent=1 // pred_check_branch
      %113 = sbr.rel (0) target = $region33
    $region32: #{tpu_custom_call.1} parent=1 // pred_region
      %114 = dma.done [#allocation3], 16
    $region33: #{tpu_custom_call.1} parent=1 // pred_fallthru
      _
    // Predicated region
    $region34: #{tpu_custom_call.1} parent=1 // pred_check
      _
    $region35: #{tpu_custom_call.1} parent=1 // pred_check_branch
      %116 = sbr.rel (0) target = $region37
    $region36: #{tpu_custom_call.1} parent=1 // pred_region
      %117 = dma.done [#allocation9], 48
    $region37: #{tpu_custom_call.1} parent=1 // pred_fallthru
      _
    %118 = vsyncpa [#allocation3], 1
    %119 = vsyncpa [#allocation9], 1
    %120 = vsyncpa [#allocation4], 1
    %121 = vsyncpa [#allocation5], 1

</llo_original>
